<compile_context>
chip_gen: v5e
topology: v5e:2x2
jax: 0.10.0
libtpu: 0.0.40
codegen_flags: <defaults>
</compile_context>

<pallas_src>
import functools

import jax
import jax.numpy as jnp
from jax.experimental import pallas as pl
from jax.experimental.pallas import tpu as pltpu

HIDDEN = 64
FUSED_HIDDEN = 2 * HIDDEN  # 128: full lane width


def _round_up(x, m):
    return (x + m - 1) // m * m


def _cdiv(a, b):
    return -(-a // b)


# --------------------------------------------------------------------------
# Pallas kernel: fused actor+critic forward for one batch tile.
# --------------------------------------------------------------------------
def actor_critic_fused_kernel(s_ref, w1_ref, b1_ref, w2_ref, b2_ref,
                              w3_ref, b3_ref, out_ref):
    # bf16 MXU operands, f32 accumulation; bias/tanh in f32.
    x = s_ref[...].astype(jnp.bfloat16)          # no-op if states already bf16

    h = jnp.dot(x, w1_ref[...], preferred_element_type=jnp.float32) + b1_ref[...]
    h = jnp.tanh(h).astype(jnp.bfloat16)

    h = jnp.dot(h, w2_ref[...], preferred_element_type=jnp.float32) + b2_ref[...]
    h = jnp.tanh(h).astype(jnp.bfloat16)

    y = jnp.dot(h, w3_ref[...], preferred_element_type=jnp.float32) + b3_ref[...]
    out_ref[...] = y.astype(out_ref.dtype)       # lane-dense (TILE_B, 128) bf16 store


# --------------------------------------------------------------------------
# Parameter construction (mirrors torch.nn.init.orthogonal_ + zero bias).
# --------------------------------------------------------------------------
def orthogonal_init(key, shape, gain):
    """Orthogonal init for a PyTorch-style (out_features, in_features) weight."""
    rows, cols = shape
    n, m = max(rows, cols), min(rows, cols)
    a = jax.random.normal(key, (n, m), dtype=jnp.float32)
    q, r = jnp.linalg.qr(a)
    d = jnp.diagonal(r)
    q = q * jnp.where(d == 0, 1.0, jnp.sign(d))[None, :]
    if rows < cols:
        q = q.T
    return gain * q[:rows, :cols]


def make_params(num_inputs, num_outputs, key):
    """Original (un-fused) per-layer parameters, used by the pure-JAX reference."""
    keys = jax.random.split(key, 6)

    def linear(k, in_f, out_f, std):
        w_pt = orthogonal_init(k, (out_f, in_f), std)     # torch layout (out, in)
        w = jnp.asarray(w_pt.T, dtype=jnp.float32)        # kernel layout (in, out)
        b = jnp.zeros((1, out_f), dtype=jnp.float32)      # bias_const = 0.0
        return w, b

    aw1, ab1 = linear(keys[0], num_inputs, HIDDEN, 1.0)
    aw2, ab2 = linear(keys[1], HIDDEN, HIDDEN, 1.0)
    aw3, ab3 = linear(keys[2], HIDDEN, num_outputs, 0.01)
    alogstd = jnp.zeros((1, num_outputs), dtype=jnp.float32)
    cw1, cb1 = linear(keys[3], num_inputs, HIDDEN, 1.0)
    cw2, cb2 = linear(keys[4], HIDDEN, HIDDEN, 1.0)
    cw3, cb3 = linear(keys[5], HIDDEN, 1, 1.0)
    return (aw1, ab1, aw2, ab2, aw3, ab3, alogstd,
            cw1, cb1, cw2, cb2, cw3, cb3)


def fuse_params(params):
    """Pack the two towers into 128-wide fused bf16 weights + f32 biases.

    Called ONCE at init (hoisted out of the forward path).
    """
    (aw1, ab1, aw2, ab2, aw3, ab3, alogstd,
     cw1, cb1, cw2, cb2, cw3, cb3) = params
    num_outputs = aw3.shape[1]
    out_pad = max(128, _round_up(num_outputs + 1, 128))           # lane-dense slab

    w1 = jnp.concatenate([aw1, cw1], axis=1)                      # (in, 128)
    b1 = jnp.concatenate([ab1, cb1], axis=1)                      # (1, 128)

    w2 = jnp.zeros((FUSED_HIDDEN, FUSED_HIDDEN), jnp.float32)     # block-diag
    w2 = w2.at[:HIDDEN, :HIDDEN].set(aw2)
    w2 = w2.at[HIDDEN:, HIDDEN:].set(cw2)
    b2 = jnp.concatenate([ab2, cb2], axis=1)                      # (1, 128)

    w3 = jnp.zeros((FUSED_HIDDEN, out_pad), jnp.float32)
    w3 = w3.at[:HIDDEN, :num_outputs].set(aw3)                    # mean columns
    w3 = w3.at[HIDDEN:, num_outputs:num_outputs + 1].set(cw3)     # value column
    b3 = jnp.zeros((1, out_pad), jnp.float32)
    b3 = b3.at[:, :num_outputs].set(ab3)
    b3 = b3.at[:, num_outputs:num_outputs + 1].set(cb3)

    return (w1.astype(jnp.bfloat16), b1,
            w2.astype(jnp.bfloat16), b2,
            w3.astype(jnp.bfloat16), b3,
            alogstd)


# --------------------------------------------------------------------------
# Wrapper: batch-tiled pallas_call (jitted so slices/broadcast fuse downstream).
# --------------------------------------------------------------------------
@functools.partial(jax.jit, static_argnames=("tile_b",))
def actor_critic_forward(states, fused_params, *, tile_b=2048):
    w1, b1, w2, b2, w3, b3, alogstd = fused_params
    num_outputs = alogstd.shape[1]
    batch, num_inputs = states.shape
    out_pad = w3.shape[1]

    # Batch tile: multiple of 8 sublanes, capped near batch/2 so the parallel grid
    # keeps >= 2 steps (v7x megacore engages both TensorCores).
    half = _round_up(max(_cdiv(batch, 2), 8), 8)
    tb = max(8, min(tile_b, half, _round_up(batch, 8)))
    grid = (_cdiv(batch, tb),)
    rows = grid[0] * tb

    flops = 2 * rows * (num_inputs * FUSED_HIDDEN
                        + FUSED_HIDDEN * FUSED_HIDDEN
                        + FUSED_HIDDEN * out_pad)
    bytes_accessed = (batch * num_inputs * states.dtype.itemsize
                      + batch * out_pad * 2                      # bf16 output slab
                      + sum(a.size * a.dtype.itemsize for a in (w1, b1, w2, b2, w3, b3)))
    cost = pl.CostEstimate(flops=flops,
                           transcendentals=2 * FUSED_HIDDEN * rows,
                           bytes_accessed=bytes_accessed)

    def resident(shape):
        # Weights/biases: full-array block, same block every grid step -> VMEM-resident.
        return pl.BlockSpec(shape, lambda i: (0, 0))

    slab = pl.pallas_call(
        actor_critic_fused_kernel,
        out_shape=jax.ShapeDtypeStruct((batch, out_pad), jnp.bfloat16),
        grid=grid,
        in_specs=[
            pl.BlockSpec((tb, num_inputs), lambda i: (i, 0)),     # states tile
            resident(w1.shape), resident(b1.shape),
            resident(w2.shape), resident(b2.shape),
            resident(w3.shape), resident(b3.shape),
        ],
        out_specs=pl.BlockSpec((tb, out_pad), lambda i: (i, 0)),
        compiler_params=pltpu.CompilerParams(
            dimension_semantics=("parallel",),                    # megacore on v7x
            vmem_limit_bytes=32 << 20),                           # lift v5e's 16 MiB default
        cost_estimate=cost,
    )(states, w1, b1, w2, b2, w3, b3)

    # Slices + broadcast stay under this jit so they fuse with downstream consumers.
    action_mean = slab[:, :num_outputs].astype(jnp.float32)
    critic_value = slab[:, num_outputs:num_outputs + 1].astype(jnp.float32)
    action_logstd = jnp.broadcast_to(alogstd, action_mean.shape)
    return action_mean, action_logstd, critic_value


# --------------------------------------------------------------------------
# Pure-JAX f32 reference for sanity checking (original, un-fused params).
# --------------------------------------------------------------------------
def actor_critic_ref(states, params):
    (aw1, ab1, aw2, ab2, aw3, ab3, alogstd,
     cw1, cb1, cw2, cb2, cw3, cb3) = params
    a = jnp.tanh(states @ aw1 + ab1)
    a = jnp.tanh(a @ aw2 + ab2)
    mean = a @ aw3 + ab3
    logstd = jnp.broadcast_to(alogstd, mean.shape)
    c = jnp.tanh(states @ cw1 + cb1)
    c = jnp.tanh(c @ cw2 + cb2)
    value = c @ cw3 + cb3
    return mean, logstd, value


if __name__ == "__main__":
    key = jax.random.PRNGKey(0)
    k_params, k_states = jax.random.split(key)

    num_inputs, num_outputs = 32, 8
    params = make_params(num_inputs, num_outputs, k_params)
    fused = fuse_params(params)          # built once at init, outside the forward path

    # Case 1: tiny batch (single grid step).
    batch = 4
    states = jax.random.normal(k_states, (batch, num_inputs), dtype=jnp.float32)
    mean, logstd, value = jax.block_until_ready(actor_critic_forward(states, fused))
    r_mean, r_logstd, r_value = actor_critic_ref(states, params)
    assert mean.shape == (batch, num_outputs)
    assert logstd.shape == (batch, num_outputs)
    assert value.shape == (batch, 1)
    # bf16 MXU operands / bf16 output slab with f32 accumulation -> relaxed tolerances.
    assert jnp.allclose(mean, r_mean, atol=5e-2, rtol=5e-2)
    assert jnp.allclose(logstd, r_logstd, atol=1e-6)
    assert jnp.allclose(value, r_value, atol=5e-2, rtol=5e-2)

    # Case 2: ragged batch that exercises multi-step grid + masked tail writes.
    batch2 = 20
    states2 = jax.random.normal(jax.random.PRNGKey(1), (batch2, num_inputs),
                                dtype=jnp.float32)
    mean2, logstd2, value2 = jax.block_until_ready(actor_critic_forward(states2, fused))
    r_mean2, r_logstd2, r_value2 = actor_critic_ref(states2, params)
    assert mean2.shape == (batch2, num_outputs)
    assert value2.shape == (batch2, 1)
    assert jnp.allclose(mean2, r_mean2, atol=5e-2, rtol=5e-2)
    assert jnp.allclose(logstd2, r_logstd2, atol=1e-6)
    assert jnp.allclose(value2, r_value2, atol=5e-2, rtol=5e-2)

    print("KERNEL_OK")
</pallas_src>

<mosaic_0001>
module attributes {stable_mosaic.version = 11 : i64} {
  func.func @actor_critic_fused_kernel(%arg0: i32, %arg1: memref<8x32xf32, #tpu.memory_space<vmem>>, %arg2: memref<32x128xbf16, #tpu.memory_space<vmem>>, %arg3: memref<1x128xf32, #tpu.memory_space<vmem>>, %arg4: memref<128x128xbf16, #tpu.memory_space<vmem>>, %arg5: memref<1x128xf32, #tpu.memory_space<vmem>>, %arg6: memref<128x128xbf16, #tpu.memory_space<vmem>>, %arg7: memref<1x128xf32, #tpu.memory_space<vmem>>, %arg8: memref<8x128xbf16, #tpu.memory_space<vmem>>) attributes {dimension_semantics = [#tpu.dimension_semantics<parallel>], iteration_bounds = array<i64: 1>, scalar_prefetch = 0 : i64, scratch_operands = 0 : i64, tpu.core_type = #tpu.core_type<tc>, window_params = [{transform_indices = @transform_0, window_bounds = array<i64: 8, 32>}, {pipeline_mode = #tpu.pipeline_mode<synchronous>, transform_indices = @transform_1, window_bounds = array<i64: 32, 128>}, {pipeline_mode = #tpu.pipeline_mode<synchronous>, transform_indices = @transform_2, window_bounds = array<i64: 1, 128>}, {pipeline_mode = #tpu.pipeline_mode<synchronous>, transform_indices = @transform_3, window_bounds = array<i64: 128, 128>}, {pipeline_mode = #tpu.pipeline_mode<synchronous>, transform_indices = @transform_4, window_bounds = array<i64: 1, 128>}, {pipeline_mode = #tpu.pipeline_mode<synchronous>, transform_indices = @transform_5, window_bounds = array<i64: 128, 128>}, {pipeline_mode = #tpu.pipeline_mode<synchronous>, transform_indices = @transform_6, window_bounds = array<i64: 1, 128>}, {transform_indices = @transform_7, window_bounds = array<i64: 8, 128>}]} {
    %c0 = arith.constant 0 : index
    %c0_0 = arith.constant 0 : index
    %0 = vector.load %arg1[%c0, %c0_0] : memref<8x32xf32, #tpu.memory_space<vmem>>, vector<8x32xf32>
    %1 = arith.truncf %0 : vector<8x32xf32> to vector<8x32xbf16>
    %c0_1 = arith.constant 0 : index
    %c0_2 = arith.constant 0 : index
    %2 = vector.load %arg2[%c0_1, %c0_2] : memref<32x128xbf16, #tpu.memory_space<vmem>>, vector<32x128xbf16>
    %cst = arith.constant dense<0.000000e+00> : vector<8x128xf32>
    %3 = tpu.matmul %1, %2, %cst {dimension_numbers = #tpu.dot_dimension_numbers<[1], [0], [0], [1], [0, 0, 1, 1], [], []>} : vector<8x32xbf16>, vector<32x128xbf16>, vector<8x128xf32> -> vector<8x128xf32>
    %c0_3 = arith.constant 0 : index
    %c0_4 = arith.constant 0 : index
    %4 = vector.load %arg3[%c0_3, %c0_4] : memref<1x128xf32, #tpu.memory_space<vmem>>, vector<1x128xf32>
    %5 = vector.broadcast %4 : vector<1x128xf32> to vector<8x128xf32>
    %6 = arith.addf %3, %5 : vector<8x128xf32>
    %7 = math.tanh %6 : vector<8x128xf32>
    %8 = arith.truncf %7 : vector<8x128xf32> to vector<8x128xbf16>
    %c0_5 = arith.constant 0 : index
    %c0_6 = arith.constant 0 : index
    %9 = vector.load %arg4[%c0_5, %c0_6] : memref<128x128xbf16, #tpu.memory_space<vmem>>, vector<128x128xbf16>
    %cst_7 = arith.constant dense<0.000000e+00> : vector<8x128xf32>
    %10 = tpu.matmul %8, %9, %cst_7 {dimension_numbers = #tpu.dot_dimension_numbers<[1], [0], [0], [1], [0, 0, 1, 1], [], []>} : vector<8x128xbf16>, vector<128x128xbf16>, vector<8x128xf32> -> vector<8x128xf32>
    %c0_8 = arith.constant 0 : index
    %c0_9 = arith.constant 0 : index
    %11 = vector.load %arg5[%c0_8, %c0_9] : memref<1x128xf32, #tpu.memory_space<vmem>>, vector<1x128xf32>
    %12 = vector.broadcast %11 : vector<1x128xf32> to vector<8x128xf32>
    %13 = arith.addf %10, %12 : vector<8x128xf32>
    %14 = math.tanh %13 : vector<8x128xf32>
    %15 = arith.truncf %14 : vector<8x128xf32> to vector<8x128xbf16>
    %c0_10 = arith.constant 0 : index
    %c0_11 = arith.constant 0 : index
    %16 = vector.load %arg6[%c0_10, %c0_11] : memref<128x128xbf16, #tpu.memory_space<vmem>>, vector<128x128xbf16>
    %cst_12 = arith.constant dense<0.000000e+00> : vector<8x128xf32>
    %17 = tpu.matmul %15, %16, %cst_12 {dimension_numbers = #tpu.dot_dimension_numbers<[1], [0], [0], [1], [0, 0, 1, 1], [], []>} : vector<8x128xbf16>, vector<128x128xbf16>, vector<8x128xf32> -> vector<8x128xf32>
    %c0_13 = arith.constant 0 : index
    %c0_14 = arith.constant 0 : index
    %18 = vector.load %arg7[%c0_13, %c0_14] : memref<1x128xf32, #tpu.memory_space<vmem>>, vector<1x128xf32>
    %19 = vector.broadcast %18 : vector<1x128xf32> to vector<8x128xf32>
    %20 = arith.addf %17, %19 : vector<8x128xf32>
    %21 = arith.truncf %20 : vector<8x128xf32> to vector<8x128xbf16>
    %c0_15 = arith.constant 0 : index
    %c0_16 = arith.constant 0 : index
    %22 = vector.load %arg8[%c0_15, %c0_16] : memref<8x128xbf16, #tpu.memory_space<vmem>>, vector<8x128xbf16>
    tpu.vector_store %arg8[%c0_15, %c0_16], %21 {strides = array<i32>} : memref<8x128xbf16, #tpu.memory_space<vmem>>, vector<8x128xbf16>,
    return
  }
  func.func @transform_0(%arg0: i32) -> (i32, i32) {
    %c0_i32 = arith.constant 0 : i32
    %c0_i32_0 = arith.constant 0 : i32
    return %arg0, %c0_i32 : i32, i32
  }
  func.func @transform_1(%arg0: i32) -> (i32, i32) {
    %c0_i32 = arith.constant 0 : i32
    %c0_i32_0 = arith.constant 0 : i32
    %c0_i32_1 = arith.constant 0 : i32
    return %c0_i32, %c0_i32_0 : i32, i32
  }
  func.func @transform_2(%arg0: i32) -> (i32, i32) {
    %c0_i32 = arith.constant 0 : i32
    %c0_i32_0 = arith.constant 0 : i32
    %c0_i32_1 = arith.constant 0 : i32
    return %c0_i32, %c0_i32_0 : i32, i32
  }
  func.func @transform_3(%arg0: i32) -> (i32, i32) {
    %c0_i32 = arith.constant 0 : i32
    %c0_i32_0 = arith.constant 0 : i32
    %c0_i32_1 = arith.constant 0 : i32
    return %c0_i32, %c0_i32_0 : i32, i32
  }
  func.func @transform_4(%arg0: i32) -> (i32, i32) {
    %c0_i32 = arith.constant 0 : i32
    %c0_i32_0 = arith.constant 0 : i32
    %c0_i32_1 = arith.constant 0 : i32
    return %c0_i32, %c0_i32_0 : i32, i32
  }
  func.func @transform_5(%arg0: i32) -> (i32, i32) {
    %c0_i32 = arith.constant 0 : i32
    %c0_i32_0 = arith.constant 0 : i32
    %c0_i32_1 = arith.constant 0 : i32
    return %c0_i32, %c0_i32_0 : i32, i32
  }
  func.func @transform_6(%arg0: i32) -> (i32, i32) {
    %c0_i32 = arith.constant 0 : i32
    %c0_i32_0 = arith.constant 0 : i32
    %c0_i32_1 = arith.constant 0 : i32
    return %c0_i32, %c0_i32_0 : i32, i32
  }
  func.func @transform_7(%arg0: i32) -> (i32, i32) {
    %c0_i32 = arith.constant 0 : i32
    %c0_i32_0 = arith.constant 0 : i32
    return %arg0, %c0_i32 : i32, i32
  }
}

</mosaic_0001>

<llo_original>
// kernel: actor_critic_forward.1
$region0: #{actor_critic_forward.1}
  #allocation0 [shape = 'u32[]', space=smem, size = 0x4, offset = 0x4, fixed_abs, tag = 'smem constant byte address 0x4 - core index']
  #allocation1 [shape = 'u32[72,128]{1,0:T(1,128)}', space=vmem, size = 0x9000, scoped, tag = 'internal scratch']
  %s0 = inlined_call_operand.hbm [shape: f32[4,32], index: 0, kind: input, shape index: {}]
  %s1 = inlined_call_operand.hbm [shape: bf16[32,128], index: 1, kind: input, shape index: {}]
  %s2 = inlined_call_operand.vmem [shape: f32[1,128], index: 2, kind: input, shape index: {}]
  %s3 = inlined_call_operand.hbm [shape: bf16[128,128], index: 3, kind: input, shape index: {}]
  %s4 = inlined_call_operand.vmem [shape: f32[1,128], index: 4, kind: input, shape index: {}]
  %s5 = inlined_call_operand.hbm [shape: bf16[128,128], index: 5, kind: input, shape index: {}]
  %s6 = inlined_call_operand.vmem [shape: f32[1,128], index: 6, kind: input, shape index: {}]
  %s7 = inlined_call_operand.vmem [shape: bf16[4,128], index: 7, kind: output, shape index: {}]
  %s8 = sld [smem:[#allocation0]]
  $region84: #{actor_critic_forward.1} parent=0
    _
  %s10 = ssub.s32 1, %s8
  %s11 = scalar_select 0, %s10, %s8
  $region1: #{actor_critic_forward.1} parent=0
    #allocation2 [shape = 'u8[4096]{0}', space=vmem, size = 0x1000, scoped, tag = 'input window, operand 0, single buffered']
    #allocation3 [shape = 's32[1]{0}', space=sflag, size = 0x4, scoped, tag = 'scoped memory for actor_critic_forward.1']
    #allocation4 [shape = 'u8[8192]{0}', space=vmem, size = 0x2000, scoped, tag = 'input window, operand 1, single buffered']
    #allocation5 [shape = 's32[1]{0}', space=sflag, size = 0x4, scoped, tag = 'scoped memory for actor_critic_forward.1']
    #allocation6 [shape = 'u8[32768]{0}', space=vmem, size = 0x8000, scoped, tag = 'input window, operand 3, single buffered']
    #allocation7 [shape = 'u8[32768]{0}', space=vmem, size = 0x8000, scoped, tag = 'input window, operand 5, single buffered']
    #allocation8 [shape = 's32[1]{0}', space=sflag, size = 0x4, scoped, tag = 'scoped memory for actor_critic_forward.1']
    #allocation9 [shape = 'u8[2048]{0}', space=vmem, size = 0x800, scoped, tag = 'output window, operand 0, single buffered']
    %12 = vsyncpa [#allocation3], 0
    %13 = vsyncpa [#allocation5], 0
    %14 = vsyncpa [#allocation8], 0
    // Predicated region
    $region2: #{actor_critic_forward.1} parent=1 // pred_check
      _
    $region3: #{actor_critic_forward.1} parent=1 // pred_check_branch
      %16 = sbr.rel (0) target = $region5
    $region4: #{actor_critic_forward.1} parent=1 // pred_region
      %18 = vsyncadd [#allocation3], 64
      %s19 = sshll.u32 %s0, 4
      %s20 = int_to_ptr.hbm [resolvable:$true] %s19
      %s21 = sshll.u32 [#allocation2], 4
      %s22 = int_to_ptr.vmem [resolvable:$true] %s21
      %27 = dma.hbm_to_vmem [thread:$0]  %s20, 64, %s22, [#allocation3], 64, 64, 4
    $region5: #{actor_critic_forward.1} parent=1 // pred_fallthru
      _
    // Predicated region
    $region6: #{actor_critic_forward.1} parent=1 // pred_check
      _
    $region7: #{actor_critic_forward.1} parent=1 // pred_check_branch
      %29 = sbr.rel (0) target = $region9
    $region8: #{actor_critic_forward.1} parent=1 // pred_region
      %31 = vsyncadd [#allocation5], 0
      %s32 = sshll.u32 %s1, 4
      %s33 = int_to_ptr.hbm [resolvable:$true] %s32
      %s34 = sshll.u32 [#allocation4], 4
      %s35 = int_to_ptr.vmem [resolvable:$true] %s34
      %40 = dma.hbm_to_vmem [thread:$0]  %s33, 256, %s35, [#allocation5], 64, 64, 4
    $region9: #{actor_critic_forward.1} parent=1 // pred_fallthru
      _
    // Predicated region
    $region10: #{actor_critic_forward.1} parent=1 // pred_check
      _
    $region11: #{actor_critic_forward.1} parent=1 // pred_check_branch
      %42 = sbr.rel (0) target = $region13
    $region12: #{actor_critic_forward.1} parent=1 // pred_region
      _
    $region13: #{actor_critic_forward.1} parent=1 // pred_fallthru
      _
    // Predicated region
    $region14: #{actor_critic_forward.1} parent=1 // pred_check
      _
    $region15: #{actor_critic_forward.1} parent=1 // pred_check_branch
      %44 = sbr.rel (0) target = $region17
    $region16: #{actor_critic_forward.1} parent=1 // pred_region
      %46 = vsyncadd [#allocation5], 0
      %s47 = sshll.u32 %s3, 4
      %s48 = int_to_ptr.hbm [resolvable:$true] %s47
      %s49 = sshll.u32 [#allocation6], 4
      %s50 = int_to_ptr.vmem [resolvable:$true] %s49
      %55 = dma.hbm_to_vmem [thread:$0]  %s48, 1024, %s50, [#allocation5], 64, 64, 4
    $region17: #{actor_critic_forward.1} parent=1 // pred_fallthru
      _
    // Predicated region
    $region18: #{actor_critic_forward.1} parent=1 // pred_check
      _
    $region19: #{actor_critic_forward.1} parent=1 // pred_check_branch
      %57 = sbr.rel (0) target = $region21
    $region20: #{actor_critic_forward.1} parent=1 // pred_region
      _
    $region21: #{actor_critic_forward.1} parent=1 // pred_fallthru
      _
    // Predicated region
    $region22: #{actor_critic_forward.1} parent=1 // pred_check
      _
    $region23: #{actor_critic_forward.1} parent=1 // pred_check_branch
      %59 = sbr.rel (0) target = $region25
    $region24: #{actor_critic_forward.1} parent=1 // pred_region
      %61 = vsyncadd [#allocation8], 0
      %s62 = sshll.u32 %s5, 4
      %s63 = int_to_ptr.hbm [resolvable:$true] %s62
      %s64 = sshll.u32 [#allocation7], 4
      %s65 = int_to_ptr.vmem [resolvable:$true] %s64
      %70 = dma.hbm_to_vmem [thread:$0]  %s63, 1024, %s65, [#allocation8], 64, 64, 4
    $region25: #{actor_critic_forward.1} parent=1 // pred_fallthru
      _
    // Predicated region
    $region26: #{actor_critic_forward.1} parent=1 // pred_check
      _
    $region27: #{actor_critic_forward.1} parent=1 // pred_check_branch
      %72 = sbr.rel (0) target = $region29
    $region28: #{actor_critic_forward.1} parent=1 // pred_region
      _
    $region29: #{actor_critic_forward.1} parent=1 // pred_fallthru
      _
    // Predicated region
    $region30: #{actor_critic_forward.1} parent=1 // pred_check
      _
    $region31: #{actor_critic_forward.1} parent=1 // pred_check_branch
      %74 = sbr.rel (0) target = $region33
    $region32: #{actor_critic_forward.1} parent=1 // pred_region
      %76 = dma.done [#allocation3], 128
    $region33: #{actor_critic_forward.1} parent=1 // pred_fallthru
      _
    // Predicated region
    $region34: #{actor_critic_forward.1} parent=1 // pred_check
      _
    $region35: #{actor_critic_forward.1} parent=1 // pred_check_branch
      %78 = sbr.rel (0) target = $region37
    $region36: #{actor_critic_forward.1} parent=1 // pred_region
      %80 = dma.done [#allocation5], 256
    $region37: #{actor_critic_forward.1} parent=1 // pred_fallthru
      _
    // Predicated region
    $region38: #{actor_critic_forward.1} parent=1 // pred_check
      _
    $region39: #{actor_critic_forward.1} parent=1 // pred_check_branch
      %82 = sbr.rel (0) target = $region41
    $region40: #{actor_critic_forward.1} parent=1 // pred_region
      %84 = dma.done [#allocation5], 1024
    $region41: #{actor_critic_forward.1} parent=1 // pred_fallthru
      _
    // Predicated region
    $region42: #{actor_critic_forward.1} parent=1 // pred_check
      _
    $region43: #{actor_critic_forward.1} parent=1 // pred_check_branch
      %86 = sbr.rel (0) target = $region45
    $region44: #{actor_critic_forward.1} parent=1 // pred_region
      %88 = dma.done [#allocation8], 1024
    $region45: #{actor_critic_forward.1} parent=1 // pred_fallthru
      _
    %v90 = vld [vmem:[#allocation2] sm:$0xff]
    %v91 = vpack.c.bf16 %v90, %v90
    %v92 = vld [vmem:[#allocation4] sm:$0xf]
    %v93 = vld [vmem:[#allocation4 + $0x4] sm:$0xf]
    %v94 = vld [vmem:[#allocation4 + $0x8] sm:$0xf]
    %v95 = vld [vmem:[#allocation4 + $0xc] sm:$0xf]
    %v96 = vld [vmem:[%s2] sm:$0x1]
    %v98 = vperm.slane %v96, 0
    %v104 = vunpack.c.l.b16 %v92
    %v105 = vunpack.c.l.b16 %v93
    %v106 = vunpack.c.l.b16 %v94
    %v107 = vunpack.c.l.b16 %v95
    %v108 = vpack.c.b16 %v105, %v104
    %v109 = vpack.c.b16 %v107, %v106
    %vm112 = vcmask 261120
    %v114 = vsel %vm112, %v91, 0
    %116 = vmatpush.bf16.msra.mxu0 0
    %117 = vmatpush.bf16.msra.mxu0 0
    %118 = vmatpush.bf16.msra.mxu0 0
    %119 = vmatpush.bf16.msra.mxu0 0
    %120 = vmatpush.bf16.msra.mxu0 0
    %121 = vmatpush.bf16.msra.mxu0 0
    %122 = vmatpush.bf16.msra.mxu0 %v109
    %123 = vmatpush.bf16.msra.mxu0 %v108
    %124 = vmatmul.bf16.gmra.mxu0 %v114
    %v125 = vpop.f32.mrf.mxu0
    %v126 = vadd.f32 %v98, %v125
    %v127 = vpop.f32.mrf.mxu0
    %128 = vdwg.mxu0
    %v129 = vtanh.pop %v126
    %v130 = vpack.c.bf16 %v129, %v129
    %v131 = vld [vmem:[#allocation6] sm:$0xf]
    %v132 = vld [vmem:[#allocation6 + $0x4] sm:$0xf]
    %v133 = vld [vmem:[#allocation6 + $0x8] sm:$0xf]
    %v134 = vld [vmem:[#allocation6 + $0xc] sm:$0xf]
    %v135 = vld [vmem:[#allocation6 + $0x10] sm:$0xf]
    %v136 = vld [vmem:[#allocation6 + $0x14] sm:$0xf]
    %v137 = vld [vmem:[#allocation6 + $0x18] sm:$0xf]
    %v138 = vld [vmem:[#allocation6 + $0x1c] sm:$0xf]
    %v139 = vld [vmem:[#allocation6 + $0x20] sm:$0xf]
    %v140 = vld [vmem:[#allocation6 + $0x24] sm:$0xf]
    %v141 = vld [vmem:[#allocation6 + $0x28] sm:$0xf]
    %v142 = vld [vmem:[#allocation6 + $0x2c] sm:$0xf]
    %v143 = vld [vmem:[#allocation6 + $0x30] sm:$0xf]
    %v144 = vld [vmem:[#allocation6 + $0x34] sm:$0xf]
    %v145 = vld [vmem:[#allocation6 + $0x38] sm:$0xf]
    %v146 = vld [vmem:[#allocation6 + $0x3c] sm:$0xf]
    %v147 = vld [vmem:[%s4] sm:$0x1]
    %v149 = vperm.slane %v147, 0
    %v167 = vunpack.c.l.b16 %v131
    %v168 = vunpack.c.l.b16 %v132
    %v169 = vunpack.c.l.b16 %v133
    %v170 = vunpack.c.l.b16 %v134
    %v171 = vunpack.c.l.b16 %v135
    %v172 = vunpack.c.l.b16 %v136
    %v173 = vunpack.c.l.b16 %v137
    %v174 = vunpack.c.l.b16 %v138
    %v175 = vunpack.c.l.b16 %v139
    %v176 = vunpack.c.l.b16 %v140
    %v177 = vunpack.c.l.b16 %v141
    %v178 = vunpack.c.l.b16 %v142
    %v179 = vunpack.c.l.b16 %v143
    %v180 = vunpack.c.l.b16 %v144
    %v181 = vunpack.c.l.b16 %v145
    %v182 = vunpack.c.l.b16 %v146
    %v183 = vpack.c.b16 %v168, %v167
    %v184 = vpack.c.b16 %v170, %v169
    %v185 = vpack.c.b16 %v172, %v171
    %v186 = vpack.c.b16 %v174, %v173
    %v187 = vpack.c.b16 %v176, %v175
    %v188 = vpack.c.b16 %v178, %v177
    %v189 = vpack.c.b16 %v180, %v179
    %v190 = vpack.c.b16 %v182, %v181
    %199 = vmatpush.bf16.msra.mxu0 %v190
    %200 = vmatpush.bf16.msra.mxu0 %v189
    %201 = vmatpush.bf16.msra.mxu0 %v188
    %202 = vmatpush.bf16.msra.mxu0 %v187
    %203 = vmatpush.bf16.msra.mxu0 %v186
    %204 = vmatpush.bf16.msra.mxu0 %v185
    %205 = vmatpush.bf16.msra.mxu0 %v184
    %206 = vmatpush.bf16.msra.mxu0 %v183
    %207 = vmatmul.bf16.gmra.mxu0 %v130
    %v208 = vpop.f32.mrf.mxu0
    %v209 = vadd.f32 %v149, %v208
    %v210 = vpop.f32.mrf.mxu0
    %211 = vdwg.mxu0
    %v212 = vtanh.pop %v209
    %v213 = vpack.c.bf16 %v212, %v212
    %v214 = vld [vmem:[#allocation7] sm:$0xf]
    %v215 = vld [vmem:[#allocation7 + $0x4] sm:$0xf]
    %v216 = vld [vmem:[#allocation7 + $0x8] sm:$0xf]
    %v217 = vld [vmem:[#allocation7 + $0xc] sm:$0xf]
    %v218 = vld [vmem:[#allocation7 + $0x10] sm:$0xf]
    %v219 = vld [vmem:[#allocation7 + $0x14] sm:$0xf]
    %v220 = vld [vmem:[#allocation7 + $0x18] sm:$0xf]
    %v221 = vld [vmem:[#allocation7 + $0x1c] sm:$0xf]
    %v222 = vld [vmem:[#allocation7 + $0x20] sm:$0xf]
    %v223 = vld [vmem:[#allocation7 + $0x24] sm:$0xf]
    %v224 = vld [vmem:[#allocation7 + $0x28] sm:$0xf]
    %v225 = vld [vmem:[#allocation7 + $0x2c] sm:$0xf]
    %v226 = vld [vmem:[#allocation7 + $0x30] sm:$0xf]
    %v227 = vld [vmem:[#allocation7 + $0x34] sm:$0xf]
    %v228 = vld [vmem:[#allocation7 + $0x38] sm:$0xf]
    %v229 = vld [vmem:[#allocation7 + $0x3c] sm:$0xf]
    %v230 = vld [vmem:[%s6] sm:$0x1]
    %v232 = vperm.slane %v230, 0
    %v250 = vunpack.c.l.b16 %v214
    %v251 = vunpack.c.l.b16 %v215
    %v252 = vunpack.c.l.b16 %v216
    %v253 = vunpack.c.l.b16 %v217
    %v254 = vunpack.c.l.b16 %v218
    %v255 = vunpack.c.l.b16 %v219
    %v256 = vunpack.c.l.b16 %v220
    %v257 = vunpack.c.l.b16 %v221
    %v258 = vunpack.c.l.b16 %v222
    %v259 = vunpack.c.l.b16 %v223
    %v260 = vunpack.c.l.b16 %v224
    %v261 = vunpack.c.l.b16 %v225
    %v262 = vunpack.c.l.b16 %v226
    %v263 = vunpack.c.l.b16 %v227
    %v264 = vunpack.c.l.b16 %v228
    %v265 = vunpack.c.l.b16 %v229
    %v266 = vpack.c.b16 %v251, %v250
    %v267 = vpack.c.b16 %v253, %v252
    %v268 = vpack.c.b16 %v255, %v254
    %v269 = vpack.c.b16 %v257, %v256
    %v270 = vpack.c.b16 %v259, %v258
    %v271 = vpack.c.b16 %v261, %v260
    %v272 = vpack.c.b16 %v263, %v262
    %v273 = vpack.c.b16 %v265, %v264
    %282 = vmatpush.bf16.msra.mxu0 %v273
    %283 = vmatpush.bf16.msra.mxu0 %v272
    %284 = vmatpush.bf16.msra.mxu0 %v271
    %285 = vmatpush.bf16.msra.mxu0 %v270
    %286 = vmatpush.bf16.msra.mxu0 %v269
    %287 = vmatpush.bf16.msra.mxu0 %v268
    %288 = vmatpush.bf16.msra.mxu0 %v267
    %289 = vmatpush.bf16.msra.mxu0 %v266
    %290 = vmatmul.bf16.gmra.mxu0 %v213
    %v291 = vpop.f32.mrf.mxu0
    %v292 = vadd.f32 %v232, %v291
    %v293 = vpop.f32.mrf.mxu0
    %294 = vdwg.mxu0
    %v295 = vpack.c.bf16 %v292, %v292
    %v297 = vrot.slane %v295, 2
    %vm298 = vcmask 1041408
    %v301 = vsel %vm298, %v295, %v297
    %vm302 = vcmask 1043458
    %v303 = vsel %vm302, %v295, %v297
    %v305 = vrot.slane %v303, 2
    %308 = vst [vmem:[#allocation9] sm:$0x3] %v301
    %309 = vst [vmem:[#allocation9 + $0x2] sm:$0x3] %v305
    // Predicated region
    $region46: #{actor_critic_forward.1} parent=1 // pred_check
      _
    $region47: #{actor_critic_forward.1} parent=1 // pred_check_branch
      %311 = sbr.rel (0) target = $region49
    $region48: #{actor_critic_forward.1} parent=1 // pred_region
      // Predicated region
      $region50: #{actor_critic_forward.1} parent=48 // pred_check
        _
      $region51: #{actor_critic_forward.1} parent=48 // pred_check_branch
        %313 = sbr.rel (0) target = $region53
      $region52: #{actor_critic_forward.1} parent=48 // pred_region
        // Predicated region
        $region54: #{actor_critic_forward.1} parent=52 // pred_check
          _
        $region55: #{actor_critic_forward.1} parent=52 // pred_check_branch
          %315 = sbr.rel target = $region57
        $region56: #{actor_critic_forward.1} parent=52 // pred_region
          // Predicated region
          $region69: #{actor_critic_forward.1} parent=56 // pred_check
            _
          $region70: #{actor_critic_forward.1} parent=56 // pred_check_branch
            %331 = sbr.rel (0) target = $region72
          $region71: #{actor_critic_forward.1} parent=56 // pred_region
            %s333 = ssub.s32 4, 1
            loop: start=0, step=1, limit=1
            $region73: #{actor_critic_forward.1} parent=71 // loop_pre_header
              _
            $region74: #{actor_critic_forward.1} parent=71 // loop_header
              %s335 = sphi 0, %s339
              %p336 = scmp.ge.s32.totalorder %s335, 1
              %s340 = sphi [#allocation9], [#allocation9]
              %s341 = sphi %s7, %s7
            $region75: #{actor_critic_forward.1} parent=71 // loop_header_branch
              %338 = sbr.rel (%p336) target = $region79
            $region76: #{actor_critic_forward.1} parent=71 // loop_body
              %v342 = vld [vmem:[%s340] sm:%s333]
              %343 = vst [vmem:[%s341] sm:%s333] %v342
            $region77: #{actor_critic_forward.1} parent=71 // loop_footer
              %s339 = sadd.s32 1, %s335
            $region78: #{actor_critic_forward.1} parent=71 // loop_footer_branch
              %334 = sbr.rel target = $region74
            $region79: #{actor_critic_forward.1} parent=71 // loop_exit
              _
          $region72: #{actor_critic_forward.1} parent=56 // pred_fallthru
            _
        $region57: #{actor_critic_forward.1} parent=52 // pred_fallthru
          _
        // Predicated region
        $region58: #{actor_critic_forward.1} parent=52 // pred_check
          _
        $region59: #{actor_critic_forward.1} parent=52 // pred_check_branch
          %317 = sbr.rel (0) target = $region61
        $region60: #{actor_critic_forward.1} parent=52 // pred_region
          %s319 = ssub.s32 4, 1
          loop: start=0, step=1, limit=1
          $region62: #{actor_critic_forward.1} parent=60 // loop_pre_header
            _
          $region63: #{actor_critic_forward.1} parent=60 // loop_header
            %s321 = sphi 0, %s325
            %p322 = scmp.ge.s32.totalorder %s321, 1
            %s326 = sphi [#allocation9], [#allocation9]
            %s327 = sphi %s7, %s7
          $region64: #{actor_critic_forward.1} parent=60 // loop_header_branch
            %324 = sbr.rel (%p322) target = $region68
          $region65: #{actor_critic_forward.1} parent=60 // loop_body
            %v328 = vld [vmem:[%s326] sm:%s319]
            %329 = vst [vmem:[%s327] sm:%s319] %v328
          $region66: #{actor_critic_forward.1} parent=60 // loop_footer
            %s325 = sadd.s32 1, %s321
          $region67: #{actor_critic_forward.1} parent=60 // loop_footer_branch
            %320 = sbr.rel target = $region63
          $region68: #{actor_critic_forward.1} parent=60 // loop_exit
            _
        $region61: #{actor_critic_forward.1} parent=52 // pred_fallthru
          _
      $region53: #{actor_critic_forward.1} parent=48 // pred_fallthru
        _
      %344 = vnop
    $region49: #{actor_critic_forward.1} parent=1 // pred_fallthru
      _
    // Predicated region
    $region80: #{actor_critic_forward.1} parent=1 // pred_check
      _
    $region81: #{actor_critic_forward.1} parent=1 // pred_check_branch
      %346 = sbr.rel (0) target = $region83
    $region82: #{actor_critic_forward.1} parent=1 // pred_region
      _
    $region83: #{actor_critic_forward.1} parent=1 // pred_fallthru
      _
    %347 = vsyncpa [#allocation3], 1
    %348 = vsyncpa [#allocation5], 1
    %349 = vsyncpa [#allocation8], 1

</llo_original>
